<compile_context>
chip_gen: v7x
topology: tpu7x:2x2x1
jax: 0.10.0
libtpu: 0.0.40
codegen_flags: <defaults>
</compile_context>

<pallas_src>
import functools

import jax
import jax.numpy as jnp
from jax.experimental import pallas as pl
from jax.experimental.pallas import tpu as pltpu


def _round_up(n, m):
    return ((n + m - 1) // m) * m


def _fused_head_kernel(x_ref, w1_ref, b1_ref, *rest, num_endpoints):
    """One grid step: (tb, C) rows of x -> every endpoint's (tb, ch) output.

    rest = (w2_0, b2_0, ..., w2_{N-1}, b2_{N-1}, o_0, ..., o_{N-1})

    x_ref  : (tb, C)      f32   (cast to bf16 here, not in the wrapper)
    w1_ref : (C, N*H)     bf16  (stacked per-endpoint first layers, resident)
    b1_ref : (1, N*H)     f32
    w2_e   : (N*H, ch_e)  bf16  (zero rows outside endpoint e's hidden block)
    b2_e   : (1, ch_e)    f32
    o_e    : (tb, ch_e)   f32
    """
    n = num_endpoints
    w2_refs = rest[0:2 * n:2]
    b2_refs = rest[1:2 * n:2]
    o_refs = rest[2 * n:]

    x = x_ref[...].astype(jnp.bfloat16)
    # Fused first layer for all endpoints on the MXU, f32 accumulation.
    h = jnp.dot(x, w1_ref[...], preferred_element_type=jnp.float32)
    h = jnp.maximum(h + b1_ref[...], 0.0)          # bias + ReLU in f32 (VPU)
    h = h.astype(jnp.bfloat16)

    # Per-endpoint second layer; zero rows in w2_e do the block selection,
    # so no lane slicing of h is required.
    for w2_ref, b2_ref, o_ref in zip(w2_refs, b2_refs, o_refs):
        y = jnp.dot(h, w2_ref[...], preferred_element_type=jnp.float32)
        o_ref[...] = (y + b2_ref[...]).astype(o_ref.dtype)


def _fused_forward(x, w1, b1, w2s, b2s):
    """Single pallas_call over the batch; returns per-endpoint outputs."""
    B, C = x.shape
    hs = int(w1.shape[1])                 # N * H (unpadded)
    n = len(w2s)
    chs = tuple(int(w.shape[1]) for w in w2s)

    # Batch tile: big (amortize ~0.35 us/step) but split into >=~4 blocks for
    # large B so v7x's two TensorCores both get work.  Multiple of 8/16 keeps
    # sublane packing clean; never larger than the (rounded) batch.
    tb = max(16, min(1024, _round_up(-(-B // 4), 16)))
    tb = min(tb, _round_up(B, 8))
    grid = (pl.cdiv(B, tb),)

    in_specs = [
        pl.BlockSpec((tb, C), lambda i: (i, 0)),      # x: tiled on batch, full C
        pl.BlockSpec((C, hs), lambda i: (0, 0)),      # stacked W1: VMEM resident
        pl.BlockSpec((1, hs), lambda i: (0, 0)),      # b1: VMEM resident
    ]
    args = [x, w1, b1]
    for w2, b2, ch in zip(w2s, b2s, chs):
        in_specs.append(pl.BlockSpec((hs, ch), lambda i: (0, 0)))   # W2_e
        in_specs.append(pl.BlockSpec((1, ch), lambda i: (0, 0)))    # b2_e
        args.append(w2)
        args.append(b2)

    out_shapes = tuple(jax.ShapeDtypeStruct((B, ch), jnp.float32) for ch in chs)
    out_specs = tuple(pl.BlockSpec((tb, ch), lambda i: (i, 0)) for ch in chs)

    total_out = sum(chs)
    flops = 2 * B * (C * hs + hs * total_out)
    bytes_accessed = (B * C * 4 + B * total_out * 4
                      + w1.size * 2 + b1.size * 4
                      + sum(w.size * 2 for w in w2s)
                      + sum(b.size * 4 for b in b2s))

    return pl.pallas_call(
        functools.partial(_fused_head_kernel, num_endpoints=n),
        out_shape=out_shapes,
        grid=grid,
        in_specs=in_specs,
        out_specs=out_specs,
        compiler_params=pltpu.CompilerParams(
            dimension_semantics=("parallel",)),
        cost_estimate=pl.CostEstimate(
            flops=int(flops),
            transcendentals=0,
            bytes_accessed=int(bytes_accessed)),
    )(*args)


class EmbeddingExtraTargetHeadPallas:
    """JAX/Pallas port of EmbeddingExtraTargetHead (synthetic, deterministic init)."""

    def __init__(self, input_channels, endpoints, key):
        self.input_channels = input_channels
        self.endpoints = endpoints
        self.params = {}

        C = input_channels
        H = C // 2
        N = len(endpoints)
        HS = N * H

        # --- PyTorch-like per-endpoint parameters (f32 masters) -------------
        for name, ch in endpoints:
            key, k1, k2, k3, k4 = jax.random.split(key, 5)
            bound1 = 1.0 / (C ** 0.5)
            bound2 = 1.0 / (H ** 0.5)
            w1 = jax.random.uniform(k1, (H, C), jnp.float32, -bound1, bound1)
            b1 = jax.random.uniform(k2, (H,), jnp.float32, -bound1, bound1)
            w2 = jax.random.uniform(k3, (ch, H), jnp.float32, -bound2, bound2)
            b2 = jax.random.uniform(k4, (ch,), jnp.float32, -bound2, bound2)
            self.params[name] = (w1, b1, w2, b2)

        # --- Fused (unpadded) kernel parameters, built once ------------------
        w1_f = jnp.zeros((C, HS), jnp.float32)
        b1_f = jnp.zeros((1, HS), jnp.float32)
        w2_list, b2_list = [], []
        for e, (name, ch) in enumerate(endpoints):
            w1, b1, w2, b2 = self.params[name]
            lo, hi = e * H, (e + 1) * H
            w1_f = w1_f.at[:, lo:hi].set(w1.T)                       # (C, H) slab
            b1_f = b1_f.at[0, lo:hi].set(b1)
            w2_e = jnp.zeros((HS, ch), jnp.float32).at[lo:hi, :].set(w2.T)
            w2_list.append(w2_e.astype(jnp.bfloat16))
            b2_list.append(b2[None, :].astype(jnp.float32))

        # bf16 matmul operands (f32 accumulate in-kernel); biases stay f32.
        self._w1 = w1_f.astype(jnp.bfloat16)
        self._b1 = b1_f
        self._w2s = tuple(w2_list)
        self._b2s = tuple(b2_list)

        # Single jitted forward covering all endpoints (one host dispatch).
        self._jit_forward = jax.jit(_fused_forward)

    def __call__(self, x):
        outs = self._jit_forward(x, self._w1, self._b1, self._w2s, self._b2s)
        return list(outs)

    def reference(self, x):
        """Pure-JAX f32 reference for correctness check."""
        outs = []
        for name, _ in self.endpoints:
            w1, b1, w2, b2 = self.params[name]
            h = jnp.maximum(x @ w1.T + b1, 0.0)
            outs.append(h @ w2.T + b2)
        return outs


if __name__ == "__main__":
    key = jax.random.PRNGKey(0)
    k_params, k_x = jax.random.split(key)

    B = 8
    C = 32  # input_channels
    endpoints = [("embedding", 16), ("extra_target", 8)]

    head = EmbeddingExtraTargetHeadPallas(C, endpoints, k_params)

    x = jax.random.normal(k_x, (B, C), dtype=jnp.float32)

    outs = head(x)
    outs = jax.block_until_ready(outs)

    refs = head.reference(x)
    for y, r in zip(outs, refs):
        assert y.shape == r.shape
        # bf16 operands with f32 accumulation vs f32 reference -> loose tol.
        assert jnp.allclose(y, r, atol=3e-2, rtol=3e-2), float(
            jnp.max(jnp.abs(y - r)))

    print("KERNEL_OK")
</pallas_src>

<mosaic_0001>
module attributes {stable_mosaic.version = 11 : i64} {
  func.func @_fused_head_kernel(%arg0: i32, %arg1: memref<8x32xf32, #tpu.memory_space<vmem>>, %arg2: memref<32x32xbf16, #tpu.memory_space<vmem>>, %arg3: memref<1x32xf32, #tpu.memory_space<vmem>>, %arg4: memref<32x16xbf16, #tpu.memory_space<vmem>>, %arg5: memref<1x16xf32, #tpu.memory_space<vmem>>, %arg6: memref<32x8xbf16, #tpu.memory_space<vmem>>, %arg7: memref<1x8xf32, #tpu.memory_space<vmem>>, %arg8: memref<8x16xf32, #tpu.memory_space<vmem>>, %arg9: memref<8x8xf32, #tpu.memory_space<vmem>>) attributes {dimension_semantics = [#tpu.dimension_semantics<parallel>], iteration_bounds = array<i64: 1>, scalar_prefetch = 0 : i64, scratch_operands = 0 : i64, tpu.core_type = #tpu.core_type<tc>, window_params = [{transform_indices = @transform_0, window_bounds = array<i64: 8, 32>}, {pipeline_mode = #tpu.pipeline_mode<synchronous>, transform_indices = @transform_1, window_bounds = array<i64: 32, 32>}, {pipeline_mode = #tpu.pipeline_mode<synchronous>, transform_indices = @transform_2, window_bounds = array<i64: 1, 32>}, {pipeline_mode = #tpu.pipeline_mode<synchronous>, transform_indices = @transform_3, window_bounds = array<i64: 32, 16>}, {pipeline_mode = #tpu.pipeline_mode<synchronous>, transform_indices = @transform_4, window_bounds = array<i64: 1, 16>}, {pipeline_mode = #tpu.pipeline_mode<synchronous>, transform_indices = @transform_5, window_bounds = array<i64: 32, 8>}, {pipeline_mode = #tpu.pipeline_mode<synchronous>, transform_indices = @transform_6, window_bounds = array<i64: 1, 8>}, {transform_indices = @transform_7, window_bounds = array<i64: 8, 16>}, {transform_indices = @transform_8, window_bounds = array<i64: 8, 8>}]} {
    %c0 = arith.constant 0 : index
    %c0_0 = arith.constant 0 : index
    %0 = vector.load %arg1[%c0, %c0_0] : memref<8x32xf32, #tpu.memory_space<vmem>>, vector<8x32xf32>
    %1 = arith.truncf %0 : vector<8x32xf32> to vector<8x32xbf16>
    %c0_1 = arith.constant 0 : index
    %c0_2 = arith.constant 0 : index
    %2 = vector.load %arg2[%c0_1, %c0_2] : memref<32x32xbf16, #tpu.memory_space<vmem>>, vector<32x32xbf16>
    %cst = arith.constant dense<0.000000e+00> : vector<8x32xf32>
    %3 = tpu.matmul %1, %2, %cst {dimension_numbers = #tpu.dot_dimension_numbers<[1], [0], [0], [1], [0, 0, 1, 1], [], []>} : vector<8x32xbf16>, vector<32x32xbf16>, vector<8x32xf32> -> vector<8x32xf32>
    %c0_3 = arith.constant 0 : index
    %c0_4 = arith.constant 0 : index
    %4 = vector.load %arg3[%c0_3, %c0_4] : memref<1x32xf32, #tpu.memory_space<vmem>>, vector<1x32xf32>
    %5 = vector.broadcast %4 : vector<1x32xf32> to vector<8x32xf32>
    %6 = arith.addf %3, %5 : vector<8x32xf32>
    %cst_5 = arith.constant 0.000000e+00 : f32
    %7 = vector.broadcast %cst_5 : f32 to vector<8x32xf32>
    %8 = arith.maximumf %6, %7 : vector<8x32xf32>
    %9 = arith.truncf %8 : vector<8x32xf32> to vector<8x32xbf16>
    %c0_6 = arith.constant 0 : index
    %c0_7 = arith.constant 0 : index
    %10 = vector.load %arg4[%c0_6, %c0_7] : memref<32x16xbf16, #tpu.memory_space<vmem>>, vector<32x16xbf16>
    %cst_8 = arith.constant dense<0.000000e+00> : vector<8x16xf32>
    %11 = tpu.matmul %9, %10, %cst_8 {dimension_numbers = #tpu.dot_dimension_numbers<[1], [0], [0], [1], [0, 0, 1, 1], [], []>} : vector<8x32xbf16>, vector<32x16xbf16>, vector<8x16xf32> -> vector<8x16xf32>
    %c0_9 = arith.constant 0 : index
    %c0_10 = arith.constant 0 : index
    %12 = vector.load %arg5[%c0_9, %c0_10] : memref<1x16xf32, #tpu.memory_space<vmem>>, vector<1x16xf32>
    %13 = vector.broadcast %12 : vector<1x16xf32> to vector<8x16xf32>
    %14 = arith.addf %11, %13 : vector<8x16xf32>
    %c0_11 = arith.constant 0 : index
    %c0_12 = arith.constant 0 : index
    %15 = vector.load %arg8[%c0_11, %c0_12] : memref<8x16xf32, #tpu.memory_space<vmem>>, vector<8x16xf32>
    tpu.vector_store %arg8[%c0_11, %c0_12], %14 {strides = array<i32>} : memref<8x16xf32, #tpu.memory_space<vmem>>, vector<8x16xf32>,
    %c0_13 = arith.constant 0 : index
    %c0_14 = arith.constant 0 : index
    %16 = vector.load %arg6[%c0_13, %c0_14] : memref<32x8xbf16, #tpu.memory_space<vmem>>, vector<32x8xbf16>
    %cst_15 = arith.constant dense<0.000000e+00> : vector<8x8xf32>
    %17 = tpu.matmul %9, %16, %cst_15 {dimension_numbers = #tpu.dot_dimension_numbers<[1], [0], [0], [1], [0, 0, 1, 1], [], []>} : vector<8x32xbf16>, vector<32x8xbf16>, vector<8x8xf32> -> vector<8x8xf32>
    %c0_16 = arith.constant 0 : index
    %c0_17 = arith.constant 0 : index
    %18 = vector.load %arg7[%c0_16, %c0_17] : memref<1x8xf32, #tpu.memory_space<vmem>>, vector<1x8xf32>
    %19 = vector.broadcast %18 : vector<1x8xf32> to vector<8x8xf32>
    %20 = arith.addf %17, %19 : vector<8x8xf32>
    %c0_18 = arith.constant 0 : index
    %c0_19 = arith.constant 0 : index
    %21 = vector.load %arg9[%c0_18, %c0_19] : memref<8x8xf32, #tpu.memory_space<vmem>>, vector<8x8xf32>
    tpu.vector_store %arg9[%c0_18, %c0_19], %20 {strides = array<i32>} : memref<8x8xf32, #tpu.memory_space<vmem>>, vector<8x8xf32>,
    return
  }
  func.func @transform_0(%arg0: i32) -> (i32, i32) {
    %c0_i32 = arith.constant 0 : i32
    %c0_i32_0 = arith.constant 0 : i32
    return %arg0, %c0_i32 : i32, i32
  }
  func.func @transform_1(%arg0: i32) -> (i32, i32) {
    %c0_i32 = arith.constant 0 : i32
    %c0_i32_0 = arith.constant 0 : i32
    %c0_i32_1 = arith.constant 0 : i32
    return %c0_i32, %c0_i32_0 : i32, i32
  }
  func.func @transform_2(%arg0: i32) -> (i32, i32) {
    %c0_i32 = arith.constant 0 : i32
    %c0_i32_0 = arith.constant 0 : i32
    %c0_i32_1 = arith.constant 0 : i32
    return %c0_i32, %c0_i32_0 : i32, i32
  }
  func.func @transform_3(%arg0: i32) -> (i32, i32) {
    %c0_i32 = arith.constant 0 : i32
    %c0_i32_0 = arith.constant 0 : i32
    %c0_i32_1 = arith.constant 0 : i32
    return %c0_i32, %c0_i32_0 : i32, i32
  }
  func.func @transform_4(%arg0: i32) -> (i32, i32) {
    %c0_i32 = arith.constant 0 : i32
    %c0_i32_0 = arith.constant 0 : i32
    %c0_i32_1 = arith.constant 0 : i32
    return %c0_i32, %c0_i32_0 : i32, i32
  }
  func.func @transform_5(%arg0: i32) -> (i32, i32) {
    %c0_i32 = arith.constant 0 : i32
    %c0_i32_0 = arith.constant 0 : i32
    %c0_i32_1 = arith.constant 0 : i32
    return %c0_i32, %c0_i32_0 : i32, i32
  }
  func.func @transform_6(%arg0: i32) -> (i32, i32) {
    %c0_i32 = arith.constant 0 : i32
    %c0_i32_0 = arith.constant 0 : i32
    %c0_i32_1 = arith.constant 0 : i32
    return %c0_i32, %c0_i32_0 : i32, i32
  }
  func.func @transform_7(%arg0: i32) -> (i32, i32) {
    %c0_i32 = arith.constant 0 : i32
    %c0_i32_0 = arith.constant 0 : i32
    return %arg0, %c0_i32 : i32, i32
  }
  func.func @transform_8(%arg0: i32) -> (i32, i32) {
    %c0_i32 = arith.constant 0 : i32
    %c0_i32_0 = arith.constant 0 : i32
    return %arg0, %c0_i32 : i32, i32
  }
}

</mosaic_0001>

<llo_original>
// kernel: _fused_forward.1
$region0: #{_fused_forward.1}
  #allocation0 [shape = 'u32[]', space=smem, size = 0x4, offset = 0x4, fixed_abs, tag = 'smem constant byte address 0x4 - core index']
  #allocation1 [shape = 'u32[144,128]{1,0:T(1,128)}', space=vmem, size = 0x12000, scoped, tag = 'internal scratch']
  %s0 = inlined_call_operand.vmem [shape: f32[8,32], index: 0, kind: input, shape index: {}]
  %s1 = inlined_call_operand.vmem [shape: bf16[32,32], index: 1, kind: input, shape index: {}]
  %s2 = inlined_call_operand.vmem [shape: f32[1,32], index: 2, kind: input, shape index: {}]
  %s3 = inlined_call_operand.vmem [shape: bf16[32,16], index: 3, kind: input, shape index: {}]
  %s4 = inlined_call_operand.vmem [shape: f32[1,16], index: 4, kind: input, shape index: {}]
  %s5 = inlined_call_operand.vmem [shape: bf16[32,8], index: 5, kind: input, shape index: {}]
  %s6 = inlined_call_operand.vmem [shape: f32[1,8], index: 6, kind: input, shape index: {}]
  %s7 = inlined_call_operand.hbm [shape: f32[8,16], index: 7, kind: output, shape index: {0}]
  %s8 = inlined_call_operand.hbm [shape: f32[8,8], index: 8, kind: output, shape index: {1}]
  %9 = xla_tuple %s7, %s8
  %s10 = sld [smem:[#allocation0]]
  $region46: #{_fused_forward.1} parent=0
    _
  %s12 = ssub.s32 1, %s10
  %s13 = scalar_select 0, %s12, %s10
  $region1: #{_fused_forward.1} parent=0
    #allocation2 [shape = 'u8[4096]{0}', space=vmem, size = 0x1000, scoped, tag = 'output window, operand 0, single buffered']
    #allocation3 [shape = 's32[1]{0}', space=sflag, size = 0x4, scoped, tag = 'scoped memory for _fused_forward.1']
    #allocation4 [shape = 'u8[4096]{0}', space=vmem, size = 0x1000, scoped, tag = 'output window, operand 1, single buffered']
    #allocation5 [shape = 's32[1]{0}', space=sflag, size = 0x4, scoped, tag = 'scoped memory for _fused_forward.1']
    %14 = vsyncpa [#allocation3], 0
    %15 = vsyncpa [#allocation5], 0
    // Predicated region
    $region2: #{_fused_forward.1} parent=1 // pred_check
      _
    $region3: #{_fused_forward.1} parent=1 // pred_check_branch
      %17 = sbr.rel (0) target = $region5
    $region4: #{_fused_forward.1} parent=1 // pred_region
      _
    $region5: #{_fused_forward.1} parent=1 // pred_fallthru
      _
    // Predicated region
    $region6: #{_fused_forward.1} parent=1 // pred_check
      _
    $region7: #{_fused_forward.1} parent=1 // pred_check_branch
      %19 = sbr.rel (0) target = $region9
    $region8: #{_fused_forward.1} parent=1 // pred_region
      _
    $region9: #{_fused_forward.1} parent=1 // pred_fallthru
      _
    // Predicated region
    $region10: #{_fused_forward.1} parent=1 // pred_check
      _
    $region11: #{_fused_forward.1} parent=1 // pred_check_branch
      %21 = sbr.rel (0) target = $region13
    $region12: #{_fused_forward.1} parent=1 // pred_region
      _
    $region13: #{_fused_forward.1} parent=1 // pred_fallthru
      _
    // Predicated region
    $region14: #{_fused_forward.1} parent=1 // pred_check
      _
    $region15: #{_fused_forward.1} parent=1 // pred_check_branch
      %23 = sbr.rel (0) target = $region17
    $region16: #{_fused_forward.1} parent=1 // pred_region
      _
    $region17: #{_fused_forward.1} parent=1 // pred_fallthru
      _
    // Predicated region
    $region18: #{_fused_forward.1} parent=1 // pred_check
      _
    $region19: #{_fused_forward.1} parent=1 // pred_check_branch
      %25 = sbr.rel (0) target = $region21
    $region20: #{_fused_forward.1} parent=1 // pred_region
      _
    $region21: #{_fused_forward.1} parent=1 // pred_fallthru
      _
    // Predicated region
    $region22: #{_fused_forward.1} parent=1 // pred_check
      _
    $region23: #{_fused_forward.1} parent=1 // pred_check_branch
      %27 = sbr.rel (0) target = $region25
    $region24: #{_fused_forward.1} parent=1 // pred_region
      _
    $region25: #{_fused_forward.1} parent=1 // pred_fallthru
      _
    // Predicated region
    $region26: #{_fused_forward.1} parent=1 // pred_check
      _
    $region27: #{_fused_forward.1} parent=1 // pred_check_branch
      %29 = sbr.rel (0) target = $region29
    $region28: #{_fused_forward.1} parent=1 // pred_region
      _
    $region29: #{_fused_forward.1} parent=1 // pred_fallthru
      _
    %v31 = vld [vmem:[%s0] sm:$0xff]
    %v32 = vpack.c.bf16 %v31, %v31
    %v33 = vld [vmem:[%s1] sm:$0xf]
    %v34 = vld [vmem:[%s1 + $0x4] sm:$0xf]
    %v35 = vld [vmem:[%s1 + $0x8] sm:$0xf]
    %v36 = vld [vmem:[%s1 + $0xc] sm:$0xf]
    %v37 = vld [vmem:[%s2] sm:$0x1]
    %v39 = vlaneseq
    %v40 = vshrl.u32 %v39, 7
    %v41 = vsub.s32 0, %v40
    %v42 = vrot.slane %v37, %v41
    %v48 = vunpack.c.l.b16 %v33
    %v49 = vunpack.c.l.b16 %v34
    %v50 = vunpack.c.l.b16 %v35
    %v51 = vunpack.c.l.b16 %v36
    %v52 = vpack.c.b16 %v49, %v48
    %v53 = vpack.c.b16 %v51, %v50
    %vm56 = vcmask 261120
    %v58 = vsel %vm56, %v32, 0
    %60 = vmatprep.subr.bf16.mxu0 0
    %61 = vmatpush1.bf16.msra.mxu0 %v52
    %62 = vmatprep.subr.bf16.mxu0 0
    %63 = vmatpush1.bf16.msra.mxu0 %v53
    %64 = vmatprep.subr.bf16.mxu0 0
    %65 = vmatpush1.bf16.msra.mxu0 0
    %66 = vmatprep.subr.bf16.mxu0 0
    %67 = vmatpush1.bf16.msra.mxu0 0
    %68 = vmatprep.subr.bf16.mxu0 0
    %69 = vmatpush1.bf16.msra.mxu0 0
    %70 = vmatprep.subr.bf16.mxu0 0
    %71 = vmatpush1.bf16.msra.mxu0 0
    %72 = vmatprep.subr.bf16.mxu0 0
    %73 = vmatpush1.bf16.msra.mxu0 0
    %74 = vmatprep.subr.bf16.mxu0 0
    %75 = vmatpush1.bf16.msra.mxu0 0
    %76 = vmatprep.subr.bf16.mxu0 0
    %77 = vmatpush1.bf16.msra.mxu0 0
    %78 = vmatprep.subr.bf16.mxu0 0
    %79 = vmatpush1.bf16.msra.mxu0 0
    %80 = vmatprep.subr.bf16.mxu0 0
    %81 = vmatpush1.bf16.msra.mxu0 0
    %82 = vmatprep.subr.bf16.mxu0 0
    %83 = vmatpush1.bf16.msra.mxu0 0
    %84 = vmatprep.subr.bf16.mxu0 0
    %85 = vmatpush1.bf16.msra.mxu0 0
    %86 = vmatprep.subr.bf16.mxu0 0
    %87 = vmatpush1.bf16.msra.mxu0 0
    %88 = vmatprep.subr.bf16.mxu0 0
    %89 = vmatpush1.bf16.msra.mxu0 0
    %90 = vmatprep.subr.bf16.mxu0 0
    %91 = vmatpush1.bf16.msra.mxu0 0
    %92 = vmatprep.mubr.bf16.mxu0 0
    %93 = vmatmul.mubr.bf16.gmra.mrb[0].mxu0 %v58
    %v94 = vpop.f32.mrb[0].mxu0
    %v95 = vadd.f32 %v42, %v94
    %v96 = vpop.f32.mrb[0].mxu0
    %v97 = vpop.f32.mrb[0].mxu0
    %v98 = vpop.f32.mrb[0].mxu0
    %99 = vdwg.mxu0
    %v100 = vmax.f32 %v95, 0.0
    %v101 = vpack.c.bf16 %v100, %v100
    %v102 = vld [vmem:[%s3] sm:$0xf]
    %v103 = vld [vmem:[%s3 + $0x4] sm:$0xf]
    %v104 = vld [vmem:[%s3 + $0x8] sm:$0xf]
    %v105 = vld [vmem:[%s3 + $0xc] sm:$0xf]
    %v106 = vld [vmem:[%s4] sm:$0x1]
    %v108 = vlaneseq
    %v109 = vshrl.u32 %v108, 7
    %v110 = vsub.s32 0, %v109
    %v111 = vrot.slane %v106, %v110
    %v117 = vunpack.c.l.b16 %v102
    %v118 = vunpack.c.l.b16 %v103
    %v119 = vunpack.c.l.b16 %v104
    %v120 = vunpack.c.l.b16 %v105
    %v121 = vpack.c.b16 %v118, %v117
    %v122 = vpack.c.b16 %v120, %v119
    %v126 = vsel %vm56, %v101, 0
    %128 = vmatprep.subr.bf16.mxu0 0
    %129 = vmatpush1.bf16.msra.mxu0 %v121
    %130 = vmatprep.subr.bf16.mxu0 0
    %131 = vmatpush1.bf16.msra.mxu0 %v122
    %132 = vmatprep.subr.bf16.mxu0 0
    %133 = vmatpush1.bf16.msra.mxu0 0
    %134 = vmatprep.subr.bf16.mxu0 0
    %135 = vmatpush1.bf16.msra.mxu0 0
    %136 = vmatprep.subr.bf16.mxu0 0
    %137 = vmatpush1.bf16.msra.mxu0 0
    %138 = vmatprep.subr.bf16.mxu0 0
    %139 = vmatpush1.bf16.msra.mxu0 0
    %140 = vmatprep.subr.bf16.mxu0 0
    %141 = vmatpush1.bf16.msra.mxu0 0
    %142 = vmatprep.subr.bf16.mxu0 0
    %143 = vmatpush1.bf16.msra.mxu0 0
    %144 = vmatprep.subr.bf16.mxu0 0
    %145 = vmatpush1.bf16.msra.mxu0 0
    %146 = vmatprep.subr.bf16.mxu0 0
    %147 = vmatpush1.bf16.msra.mxu0 0
    %148 = vmatprep.subr.bf16.mxu0 0
    %149 = vmatpush1.bf16.msra.mxu0 0
    %150 = vmatprep.subr.bf16.mxu0 0
    %151 = vmatpush1.bf16.msra.mxu0 0
    %152 = vmatprep.subr.bf16.mxu0 0
    %153 = vmatpush1.bf16.msra.mxu0 0
    %154 = vmatprep.subr.bf16.mxu0 0
    %155 = vmatpush1.bf16.msra.mxu0 0
    %156 = vmatprep.subr.bf16.mxu0 0
    %157 = vmatpush1.bf16.msra.mxu0 0
    %158 = vmatprep.subr.bf16.mxu0 0
    %159 = vmatpush1.bf16.msra.mxu0 0
    %160 = vmatprep.mubr.bf16.mxu0 0
    %161 = vmatmul.mubr.bf16.gmra.mrb[0].mxu0 %v126
    %v162 = vpop.f32.mrb[0].mxu0
    %v163 = vadd.f32 %v111, %v162
    %v164 = vpop.f32.mrb[0].mxu0
    %v165 = vpop.f32.mrb[0].mxu0
    %v166 = vpop.f32.mrb[0].mxu0
    %167 = vdwg.mxu0
    %vm168 = vcmask 130048
    %169 = vst.msk [vmem:[#allocation2] sm:$0xff] %vm168, %v163
    %v170 = vld [vmem:[%s5] sm:$0xf]
    %v171 = vld [vmem:[%s5 + $0x4] sm:$0xf]
    %v172 = vld [vmem:[%s5 + $0x8] sm:$0xf]
    %v173 = vld [vmem:[%s5 + $0xc] sm:$0xf]
    %v174 = vld [vmem:[%s6] sm:$0x1]
    %v176 = vlaneseq
    %v177 = vshrl.u32 %v176, 7
    %v178 = vsub.s32 0, %v177
    %v179 = vrot.slane %v174, %v178
    %v185 = vunpack.c.l.b16 %v170
    %v186 = vunpack.c.l.b16 %v171
    %v187 = vunpack.c.l.b16 %v172
    %v188 = vunpack.c.l.b16 %v173
    %v189 = vpack.c.b16 %v186, %v185
    %v190 = vpack.c.b16 %v188, %v187
    %193 = vmatprep.subr.bf16.mxu0 0
    %194 = vmatpush1.bf16.msra.mxu0 %v189
    %195 = vmatprep.subr.bf16.mxu0 0
    %196 = vmatpush1.bf16.msra.mxu0 %v190
    %197 = vmatprep.subr.bf16.mxu0 0
    %198 = vmatpush1.bf16.msra.mxu0 0
    %199 = vmatprep.subr.bf16.mxu0 0
    %200 = vmatpush1.bf16.msra.mxu0 0
    %201 = vmatprep.subr.bf16.mxu0 0
    %202 = vmatpush1.bf16.msra.mxu0 0
    %203 = vmatprep.subr.bf16.mxu0 0
    %204 = vmatpush1.bf16.msra.mxu0 0
    %205 = vmatprep.subr.bf16.mxu0 0
    %206 = vmatpush1.bf16.msra.mxu0 0
    %207 = vmatprep.subr.bf16.mxu0 0
    %208 = vmatpush1.bf16.msra.mxu0 0
    %209 = vmatprep.subr.bf16.mxu0 0
    %210 = vmatpush1.bf16.msra.mxu0 0
    %211 = vmatprep.subr.bf16.mxu0 0
    %212 = vmatpush1.bf16.msra.mxu0 0
    %213 = vmatprep.subr.bf16.mxu0 0
    %214 = vmatpush1.bf16.msra.mxu0 0
    %215 = vmatprep.subr.bf16.mxu0 0
    %216 = vmatpush1.bf16.msra.mxu0 0
    %217 = vmatprep.subr.bf16.mxu0 0
    %218 = vmatpush1.bf16.msra.mxu0 0
    %219 = vmatprep.subr.bf16.mxu0 0
    %220 = vmatpush1.bf16.msra.mxu0 0
    %221 = vmatprep.subr.bf16.mxu0 0
    %222 = vmatpush1.bf16.msra.mxu0 0
    %223 = vmatprep.subr.bf16.mxu0 0
    %224 = vmatpush1.bf16.msra.mxu0 0
    %225 = vmatprep.mubr.bf16.mxu0 0
    %226 = vmatmul.mubr.bf16.gmra.mrb[0].mxu0 %v126
    %v227 = vpop.f32.mrb[0].mxu0
    %v228 = vadd.f32 %v179, %v227
    %v229 = vpop.f32.mrb[0].mxu0
    %v230 = vpop.f32.mrb[0].mxu0
    %v231 = vpop.f32.mrb[0].mxu0
    %232 = vdwg.mxu0
    %vm233 = vcmask 64512
    %234 = vst.msk [vmem:[#allocation4] sm:$0xff] %vm233, %v228
    // Predicated region
    $region30: #{_fused_forward.1} parent=1 // pred_check
      _
    $region31: #{_fused_forward.1} parent=1 // pred_check_branch
      %236 = sbr.rel (0) target = $region33
    $region32: #{_fused_forward.1} parent=1 // pred_region
      %s238 = ssub.s32 128, 128
      %239 = vsyncadd [#allocation3], %s238
      %s241 = sshll.u32 [#allocation2], 4
      %s242 = int_to_ptr.vmem [resolvable:$true] %s241
      %244 = dma.vmem_to_hbm [thread:$0]  %s242, 128, %s7, [#allocation3]
    $region33: #{_fused_forward.1} parent=1 // pred_fallthru
      _
    // Predicated region
    $region34: #{_fused_forward.1} parent=1 // pred_check
      _
    $region35: #{_fused_forward.1} parent=1 // pred_check_branch
      %246 = sbr.rel (0) target = $region37
    $region36: #{_fused_forward.1} parent=1 // pred_region
      %s248 = ssub.s32 128, 128
      %249 = vsyncadd [#allocation5], %s248
      %s251 = sshll.u32 [#allocation4], 4
      %s252 = int_to_ptr.vmem [resolvable:$true] %s251
      %254 = dma.vmem_to_hbm [thread:$0]  %s252, 128, %s8, [#allocation5]
    $region37: #{_fused_forward.1} parent=1 // pred_fallthru
      _
    // Predicated region
    $region38: #{_fused_forward.1} parent=1 // pred_check
      _
    $region39: #{_fused_forward.1} parent=1 // pred_check_branch
      %256 = sbr.rel (0) target = $region41
    $region40: #{_fused_forward.1} parent=1 // pred_region
      %257 = dma.done [#allocation3], 128
    $region41: #{_fused_forward.1} parent=1 // pred_fallthru
      _
    // Predicated region
    $region42: #{_fused_forward.1} parent=1 // pred_check
      _
    $region43: #{_fused_forward.1} parent=1 // pred_check_branch
      %259 = sbr.rel (0) target = $region45
    $region44: #{_fused_forward.1} parent=1 // pred_region
      %260 = dma.done [#allocation5], 128
    $region45: #{_fused_forward.1} parent=1 // pred_fallthru
      _
    %261 = vsyncpa [#allocation3], 1
    %262 = vsyncpa [#allocation5], 1

</llo_original>
